<compile_context>
chip_gen: v6e
topology: v6e:2x2x1
jax: 0.10.0
libtpu: 0.0.40
codegen_flags: <defaults>
</compile_context>

<pallas_src>
import jax
import jax.numpy as jnp
import numpy as np
from jax.experimental import pallas as pl
from jax.experimental.pallas import tpu as pltpu


def _upsample_kernel(x_ref, o_ref):
    # x_ref: (t_r, W)       flattened (N*C*H) input rows for this tile
    # o_ref: (t_r, s, t_w)  same rows, replicated s times along axis 1 (height)
    #                       and owning output columns [k*t_w, (k+1)*t_w).
    t_r, W = x_ref.shape
    s, t_w = o_ref.shape[1], o_ref.shape[2]
    k = pl.program_id(1)

    # 0/1 lane-replication (selection) matrix generated in-kernel (pure VPU):
    #   b[w, c] = 1  iff  (k*t_w + c) // s == w
    # expressed as a range test (no integer division).
    src = jax.lax.broadcasted_iota(jnp.int32, (W, t_w), 0)
    dst = jax.lax.broadcasted_iota(jnp.int32, (W, t_w), 1) + k * t_w
    b = ((dst >= src * s) & (dst < (src + 1) * s)).astype(x_ref.dtype)

    # Width (lane) replication: one MXU selection matmul for the whole row tile.
    y = jnp.dot(
        x_ref[...], b,
        preferred_element_type=jnp.float32,
        precision=jax.lax.Precision.HIGHEST,   # exactness of the 0/1 selection
    ).astype(o_ref.dtype)

    # Height (sublane) replication: broadcast along the middle axis and write
    # the whole lane-dense block with a single unmasked store.
    o_ref[...] = jnp.broadcast_to(y[:, None, :], (t_r, s, t_w))


def _choose_tiling(R, W, s, itemsize, max_tile_bytes=8 * 1024 * 1024):
    """Pick (t_r, t_w): row tile over R = N*C*H and column tile over Wo = W*s."""
    Wo = W * s
    min_rows = 8 if R % 8 == 0 else R

    # --- column (lane) tile: prefer multiples of 128 (unmasked vst) ---
    if Wo % 128 == 0:
        t_w = 128
        d = 128
        while d <= min(Wo, 4096):
            if Wo % d == 0 and min_rows * s * d * itemsize <= max_tile_bytes:
                t_w = d
            d += 128
    else:
        t_w = Wo
        if min_rows * s * Wo * itemsize > max_tile_bytes:
            # Fallback for huge non-128-multiple Wo: largest divisor that fits
            # the VMEM budget (sacrifices lane density, never busts VMEM).
            best, i = 1, 1
            while i * i <= Wo:
                if Wo % i == 0:
                    for c in (i, Wo // i):
                        if (min_rows * s * c * itemsize <= max_tile_bytes
                                and c > best):
                            best = c
                i += 1
            t_w = best

    # --- row tile: largest multiple-of-8 divisor of R fitting the budget ---
    if R % 8 != 0:
        t_r = R
    else:
        t_r = 8
        for d in range(8, R + 1, 8):
            if R % d == 0 and d * s * t_w * itemsize <= max_tile_bytes:
                t_r = d

    # Keep at least 2 grid steps when cheaply possible (v7x megacore sharding).
    if (R // t_r) * (Wo // t_w) < 2:
        if t_r % 16 == 0:
            t_r //= 2
        elif Wo % 128 == 0 and t_w % 256 == 0:
            t_w //= 2

    return t_r, t_w


def nearest_upsample_pallas(x, scale):
    """Nearest-neighbour upsample of an NCHW tensor by integer `scale` in H and W."""
    N, C, H, W = x.shape
    s = int(scale)
    Ho, Wo = H * s, W * s
    R = N * C * H
    dtype = x.dtype
    itemsize = jnp.dtype(dtype).itemsize

    # Free (row-major-preserving) views.
    x2d = x.reshape(R, W)

    t_r, t_w = _choose_tiling(R, W, s, itemsize)
    grid = (R // t_r, Wo // t_w)

    in_tile = t_r * W * itemsize
    out_tile = t_r * s * t_w * itemsize
    vmem_limit = int(min(64 * 1024 * 1024,
                         max(32 * 1024 * 1024,
                             2 * (in_tile + out_tile) + (4 << 20))))

    out3d = pl.pallas_call(
        _upsample_kernel,
        out_shape=jax.ShapeDtypeStruct((R, s, Wo), dtype),
        grid=grid,
        in_specs=[pl.BlockSpec((t_r, W), lambda i, k: (i, 0))],
        out_specs=pl.BlockSpec((t_r, s, t_w), lambda i, k: (i, 0, k)),
        compiler_params=pltpu.CompilerParams(
            dimension_semantics=("parallel", "parallel"),
            vmem_limit_bytes=vmem_limit,
        ),
        cost_estimate=pl.CostEstimate(
            flops=2 * R * W * Wo,
            transcendentals=0,
            bytes_accessed=R * W * itemsize + R * s * Wo * itemsize,
        ),
    )(x2d)

    # (R, s, Wo) row-major == (N, C, Ho, Wo) row-major -> free reshape.
    return out3d.reshape(N, C, Ho, Wo)


@jax.jit
def model_forward(x1):
    # x3 = interpolate(x1, scale_factor=W)  -> defines the target spatial size.
    # x2 = rand_like(x3)                    -> values never consumed; only size.
    # x4 = interpolate(x1, size_of(x2))     -> identical nearest upsampling.
    # TODO(synk): torch.rand_like(x3) is never consumed numerically; omitted.
    scale = x1.shape[-1]
    return nearest_upsample_pallas(x1, scale)


if __name__ == "__main__":
    key = jax.random.PRNGKey(0)

    # Same shape as the reference script: x1 = torch.randn(1, 2, 4, 4)
    x1 = jax.random.normal(key, (1, 2, 4, 4), dtype=jnp.float32)
    out = jax.block_until_ready(model_forward(x1))
    s1 = x1.shape[-1]
    ref1 = jnp.repeat(jnp.repeat(x1, s1, axis=2), s1, axis=3)
    np.testing.assert_allclose(np.asarray(out), np.asarray(ref1),
                               rtol=1e-6, atol=1e-6)
    assert out.shape == (1, 2, 16, 16) and out.dtype == jnp.float32

    # Larger shape exercising the multi-step, lane-dense tiled path.
    x2 = jax.random.normal(jax.random.PRNGKey(1), (1, 2, 32, 32),
                           dtype=jnp.float32)
    out2 = jax.block_until_ready(model_forward(x2))
    s2 = x2.shape[-1]
    ref2 = jnp.repeat(jnp.repeat(x2, s2, axis=2), s2, axis=3)
    np.testing.assert_allclose(np.asarray(out2), np.asarray(ref2),
                               rtol=1e-6, atol=1e-6)
    assert out2.shape == (1, 2, 1024, 1024)

    print("KERNEL_OK")
</pallas_src>

<mosaic_0001>
module attributes {stable_mosaic.version = 11 : i64} {
  func.func @_upsample_kernel(%arg0: i32, %arg1: i32, %arg2: memref<8x4xf32, #tpu.memory_space<vmem>>, %arg3: memref<8x4x16xf32, #tpu.memory_space<vmem>>) attributes {dimension_semantics = [#tpu.dimension_semantics<parallel>, #tpu.dimension_semantics<parallel>], iteration_bounds = array<i64: 1, 1>, scalar_prefetch = 0 : i64, scratch_operands = 0 : i64, tpu.core_type = #tpu.core_type<tc>, window_params = [{transform_indices = @transform_0, window_bounds = array<i64: 8, 4>}, {transform_indices = @transform_1, window_bounds = array<i64: 8, 4, 16>}]} {
    %0 = tpu.iota {dimensions = array<i32: 0>} : vector<4x16xi32>
    %1 = tpu.iota {dimensions = array<i32: 1>} : vector<4x16xi32>
    %c16_i32 = arith.constant 16 : i32
    %2 = arith.muli %arg1, %c16_i32 : i32
    %3 = vector.broadcast %2 : i32 to vector<4x16xi32>
    %4 = arith.addi %1, %3 : vector<4x16xi32>
    %c4_i32 = arith.constant 4 : i32
    %5 = vector.broadcast %c4_i32 : i32 to vector<4x16xi32>
    %6 = arith.muli %0, %5 : vector<4x16xi32>
    %7 = arith.cmpi sge, %4, %6 : vector<4x16xi32>
    %c1_i32 = arith.constant 1 : i32
    %8 = vector.broadcast %c1_i32 : i32 to vector<4x16xi32>
    %9 = arith.addi %0, %8 : vector<4x16xi32>
    %c4_i32_0 = arith.constant 4 : i32
    %10 = vector.broadcast %c4_i32_0 : i32 to vector<4x16xi32>
    %11 = arith.muli %9, %10 : vector<4x16xi32>
    %12 = arith.cmpi slt, %4, %11 : vector<4x16xi32>
    %13 = arith.andi %7, %12 : vector<4x16xi1>
    %14 = arith.extui %13 : vector<4x16xi1> to vector<4x16xi32>
    %15 = arith.sitofp %14 : vector<4x16xi32> to vector<4x16xf32>
    %c0 = arith.constant 0 : index
    %c0_1 = arith.constant 0 : index
    %16 = vector.load %arg2[%c0, %c0_1] : memref<8x4xf32, #tpu.memory_space<vmem>>, vector<8x4xf32>
    %cst = arith.constant dense<0.000000e+00> : vector<8x16xf32>
    %17 = tpu.matmul %16, %15, %cst {dimension_numbers = #tpu.dot_dimension_numbers<[1], [0], [0], [1], [0, 0, 1, 1], [], []>, precision = #tpu.contract_precision<fp32>} : vector<8x4xf32>, vector<4x16xf32>, vector<8x16xf32> -> vector<8x16xf32>
    %18 = vector.shape_cast %17 : vector<8x16xf32> to vector<8x1x16xf32>
    %19 = vector.shape_cast %18 : vector<8x1x16xf32> to vector<8x1x16xf32>
    %20 = vector.broadcast %19 : vector<8x1x16xf32> to vector<8x4x16xf32>
    %c0_2 = arith.constant 0 : index
    %c0_3 = arith.constant 0 : index
    %c0_4 = arith.constant 0 : index
    %21 = vector.load %arg3[%c0_2, %c0_3, %c0_4] : memref<8x4x16xf32, #tpu.memory_space<vmem>>, vector<8x4x16xf32>
    tpu.vector_store %arg3[%c0_2, %c0_3, %c0_4], %20 {strides = array<i32>} : memref<8x4x16xf32, #tpu.memory_space<vmem>>, vector<8x4x16xf32>,
    return
  }
  func.func @transform_0(%arg0: i32, %arg1: i32) -> (i32, i32) {
    %c0_i32 = arith.constant 0 : i32
    %c0_i32_0 = arith.constant 0 : i32
    return %arg0, %c0_i32 : i32, i32
  }
  func.func @transform_1(%arg0: i32, %arg1: i32) -> (i32, i32, i32) {
    %c0_i32 = arith.constant 0 : i32
    %c0_i32_0 = arith.constant 0 : i32
    return %arg0, %c0_i32, %arg1 : i32, i32, i32
  }
}

</mosaic_0001>

<llo_original>
// kernel: model_forward.1
$region0: #{model_forward.1}
  #allocation0 [shape = 'u32[]', space=smem, size = 0x4, offset = 0x4, fixed_abs, tag = 'smem constant byte address 0x4 - core index']
  #allocation1 [shape = 'u32[144,128]{1,0:T(1,128)}', space=vmem, size = 0x12000, scoped, tag = 'internal scratch']
  %s0 = inlined_call_operand.hbm [shape: f32[8,4], index: 0, kind: input, shape index: {}]
  %s1 = inlined_call_operand.hbm [shape: f32[8,4,16], index: 1, kind: output, shape index: {}]
  %s2 = sld [smem:[#allocation0]]
  $region18: #{model_forward.1} parent=0
    _
  %s4 = ssub.s32 1, %s2
  %s5 = scalar_select 0, %s4, %s2
  $region1: #{model_forward.1} parent=0
    #allocation2 [shape = 'u8[4096]{0}', space=vmem, size = 0x1000, scoped, tag = 'input window, operand 0, single buffered']
    #allocation3 [shape = 's32[1]{0}', space=sflag, size = 0x4, scoped, tag = 'scoped memory for model_forward.1']
    #allocation4 [shape = 's32[1]{0}', space=sflag, size = 0x4, scoped, tag = 'scoped memory for model_forward.1']
    #allocation5 [shape = 'u8[16384]{0}', space=vmem, size = 0x4000, scoped, tag = 'output window, operand 0, single buffered']
    %6 = vsyncpa [#allocation3], 0
    %7 = vsyncpa [#allocation4], 0
    // Predicated region
    $region2: #{model_forward.1} parent=1 // pred_check
      _
    $region3: #{model_forward.1} parent=1 // pred_check_branch
      %9 = sbr.rel (0) target = $region5
    $region4: #{model_forward.1} parent=1 // pred_region
      %s11 = ssub.s32 128, 128
      %12 = vsyncadd [#allocation3], %s11
      %s14 = sshll.u32 [#allocation2], 4
      %s15 = int_to_ptr.vmem [resolvable:$true] %s14
      %17 = dma.hbm_to_vmem [thread:$0]  %s0, 128, %s15, [#allocation3]
    $region5: #{model_forward.1} parent=1 // pred_fallthru
      _
    // Predicated region
    $region6: #{model_forward.1} parent=1 // pred_check
      _
    $region7: #{model_forward.1} parent=1 // pred_check_branch
      %19 = sbr.rel (0) target = $region9
    $region8: #{model_forward.1} parent=1 // pred_region
      %20 = dma.done [#allocation3], 128
    $region9: #{model_forward.1} parent=1 // pred_fallthru
      _
    %v21 = vlaneseq
    %v22 = vshrl.u32 %v21, 7
    %v23 = vlaneseq
    %v24 = vand.u32 %v23, 127
    %s25 = smul.u32 0, 16
    %v26 = vstv %s25
    %v27 = vadd.s32 %v24, %v26
    %v28 = vmul.u32 %v22, 4
    %vm29 = vcmp.ge.s32.totalorder %v27, %v28
    %v30 = vadd.s32 %v22, 1
    %v31 = vmul.u32 %v30, 4
    %vm32 = vcmp.lt.s32.totalorder %v27, %v31
    %vm33 = vmand %vm29, %vm32
    %v34 = vsel %vm33, 1, 0
    %v35 = vcvt.s32.f32 %v34
    %v36 = vld [vmem:[#allocation2] sm:$0xff]
    %vm37 = vcmask 31744
    %v39 = vsel %vm37, %v36, 0
    %vm41 = vcmask 1043456
    %v43 = vsel %vm41, %v35, 0
    %45 = vmatprep.subr.mxu0 0.0
    %46 = vmatpush1.msra.mxu0 0.0
    %47 = vmatprep.subr.mxu0 0.0
    %48 = vmatpush1.msra.mxu0 0.0
    %49 = vmatprep.subr.mxu0 0.0
    %50 = vmatpush1.msra.mxu0 0.0
    %51 = vmatprep.subr.mxu0 0.0
    %52 = vmatpush1.msra.mxu0 0.0
    %53 = vmatprep.subr.mxu0 0.0
    %54 = vmatpush1.msra.mxu0 0.0
    %55 = vmatprep.subr.mxu0 0.0
    %56 = vmatpush1.msra.mxu0 0.0
    %57 = vmatprep.subr.mxu0 0.0
    %58 = vmatpush1.msra.mxu0 0.0
    %59 = vmatprep.subr.mxu0 0.0
    %60 = vmatpush1.msra.mxu0 0.0
    %61 = vmatprep.subr.mxu0 0.0
    %62 = vmatpush1.msra.mxu0 0.0
    %63 = vmatprep.subr.mxu0 0.0
    %64 = vmatpush1.msra.mxu0 0.0
    %65 = vmatprep.subr.mxu0 0.0
    %66 = vmatpush1.msra.mxu0 0.0
    %67 = vmatprep.subr.mxu0 0.0
    %68 = vmatpush1.msra.mxu0 0.0
    %69 = vmatprep.subr.mxu0 0.0
    %70 = vmatpush1.msra.mxu0 0.0
    %71 = vmatprep.subr.mxu0 0.0
    %72 = vmatpush1.msra.mxu0 0.0
    %73 = vmatprep.subr.mxu0 0.0
    %74 = vmatpush1.msra.mxu0 0.0
    %75 = vmatprep.subr.mxu0 0.0
    %v76 = vand.u32 %v43, 4294901760
    %77 = vmatpush1.msra.mxu0 %v76
    %78 = vmatprep.subr.mxu0 0.0
    %79 = vmatpush2.msra.mxu0 0.0
    %80 = vmatprep.subr.mxu0 0.0
    %81 = vmatpush2.msra.mxu0 0.0
    %82 = vmatprep.subr.mxu0 0.0
    %83 = vmatpush2.msra.mxu0 0.0
    %84 = vmatprep.subr.mxu0 0.0
    %85 = vmatpush2.msra.mxu0 0.0
    %86 = vmatprep.subr.mxu0 0.0
    %87 = vmatpush2.msra.mxu0 0.0
    %88 = vmatprep.subr.mxu0 0.0
    %89 = vmatpush2.msra.mxu0 0.0
    %90 = vmatprep.subr.mxu0 0.0
    %91 = vmatpush2.msra.mxu0 0.0
    %92 = vmatprep.subr.mxu0 0.0
    %93 = vmatpush2.msra.mxu0 0.0
    %94 = vmatprep.subr.mxu0 0.0
    %95 = vmatpush2.msra.mxu0 0.0
    %96 = vmatprep.subr.mxu0 0.0
    %97 = vmatpush2.msra.mxu0 0.0
    %98 = vmatprep.subr.mxu0 0.0
    %99 = vmatpush2.msra.mxu0 0.0
    %100 = vmatprep.subr.mxu0 0.0
    %101 = vmatpush2.msra.mxu0 0.0
    %102 = vmatprep.subr.mxu0 0.0
    %103 = vmatpush2.msra.mxu0 0.0
    %104 = vmatprep.subr.mxu0 0.0
    %105 = vmatpush2.msra.mxu0 0.0
    %106 = vmatprep.subr.mxu0 0.0
    %107 = vmatpush2.msra.mxu0 0.0
    %108 = vmatprep.subr.mxu0 0.0
    %109 = vmatpush2.msra.mxu0 0.0
    %110 = vmatprep.mubr.f32.mxu0 0.0
    %v111 = vand.u32 %v39, 4294901760
    %v112 = vsub.f32 %v39, %v111
    %v113 = vand.u32 %v112, 4294901760
    %v114 = vsub.f32 %v112, %v113
    %v115 = vand.u32 %v114, 4294901760
    %116 = vmatmul.mubr.f32.gmra.mxu0 %v115
    %v117 = vpop.f32.mrf.mxu0
    %v118 = vadd.f32 0.0, %v117
    %v119 = vpop.f32.mrf.mxu0
    %120 = vdwg.mxu0
    %121 = vmatprep.subr.mxu0 0.0
    %122 = vmatpush1.msra.mxu0 0.0
    %123 = vmatprep.subr.mxu0 0.0
    %124 = vmatpush1.msra.mxu0 0.0
    %125 = vmatprep.subr.mxu0 0.0
    %126 = vmatpush1.msra.mxu0 0.0
    %127 = vmatprep.subr.mxu0 0.0
    %128 = vmatpush1.msra.mxu0 0.0
    %129 = vmatprep.subr.mxu0 0.0
    %130 = vmatpush1.msra.mxu0 0.0
    %131 = vmatprep.subr.mxu0 0.0
    %132 = vmatpush1.msra.mxu0 0.0
    %133 = vmatprep.subr.mxu0 0.0
    %134 = vmatpush1.msra.mxu0 0.0
    %135 = vmatprep.subr.mxu0 0.0
    %136 = vmatpush1.msra.mxu0 0.0
    %137 = vmatprep.subr.mxu0 0.0
    %138 = vmatpush1.msra.mxu0 0.0
    %139 = vmatprep.subr.mxu0 0.0
    %140 = vmatpush1.msra.mxu0 0.0
    %141 = vmatprep.subr.mxu0 0.0
    %142 = vmatpush1.msra.mxu0 0.0
    %143 = vmatprep.subr.mxu0 0.0
    %144 = vmatpush1.msra.mxu0 0.0
    %145 = vmatprep.subr.mxu0 0.0
    %146 = vmatpush1.msra.mxu0 0.0
    %147 = vmatprep.subr.mxu0 0.0
    %148 = vmatpush1.msra.mxu0 0.0
    %149 = vmatprep.subr.mxu0 0.0
    %150 = vmatpush1.msra.mxu0 0.0
    %151 = vmatprep.subr.mxu0 0.0
    %v152 = vand.u32 %v43, 4294901760
    %v153 = vsub.f32 %v43, %v152
    %v154 = vand.u32 %v153, 4294901760
    %v155 = vsub.f32 %v153, %v154
    %v156 = vand.u32 %v155, 4294901760
    %157 = vmatpush1.msra.mxu0 %v156
    %158 = vmatprep.subr.mxu0 0.0
    %159 = vmatpush2.msra.mxu0 0.0
    %160 = vmatprep.subr.mxu0 0.0
    %161 = vmatpush2.msra.mxu0 0.0
    %162 = vmatprep.subr.mxu0 0.0
    %163 = vmatpush2.msra.mxu0 0.0
    %164 = vmatprep.subr.mxu0 0.0
    %165 = vmatpush2.msra.mxu0 0.0
    %166 = vmatprep.subr.mxu0 0.0
    %167 = vmatpush2.msra.mxu0 0.0
    %168 = vmatprep.subr.mxu0 0.0
    %169 = vmatpush2.msra.mxu0 0.0
    %170 = vmatprep.subr.mxu0 0.0
    %171 = vmatpush2.msra.mxu0 0.0
    %172 = vmatprep.subr.mxu0 0.0
    %173 = vmatpush2.msra.mxu0 0.0
    %174 = vmatprep.subr.mxu0 0.0
    %175 = vmatpush2.msra.mxu0 0.0
    %176 = vmatprep.subr.mxu0 0.0
    %177 = vmatpush2.msra.mxu0 0.0
    %178 = vmatprep.subr.mxu0 0.0
    %179 = vmatpush2.msra.mxu0 0.0
    %180 = vmatprep.subr.mxu0 0.0
    %181 = vmatpush2.msra.mxu0 0.0
    %182 = vmatprep.subr.mxu0 0.0
    %183 = vmatpush2.msra.mxu0 0.0
    %184 = vmatprep.subr.mxu0 0.0
    %185 = vmatpush2.msra.mxu0 0.0
    %186 = vmatprep.subr.mxu0 0.0
    %187 = vmatpush2.msra.mxu0 0.0
    %188 = vmatprep.subr.mxu0 0.0
    %189 = vmatpush2.msra.mxu0 0.0
    %190 = vmatprep.mubr.f32.mxu0 0.0
    %v191 = vand.u32 %v39, 4294901760
    %192 = vmatmul.mubr.f32.gmra.mxu0 %v191
    %v193 = vpop.f32.mrf.mxu0
    %v194 = vadd.f32 %v118, %v193
    %v195 = vpop.f32.mrf.mxu0
    %196 = vdwg.mxu0
    %197 = vmatprep.subr.mxu0 0.0
    %198 = vmatpush1.msra.mxu0 0.0
    %199 = vmatprep.subr.mxu0 0.0
    %200 = vmatpush1.msra.mxu0 0.0
    %201 = vmatprep.subr.mxu0 0.0
    %202 = vmatpush1.msra.mxu0 0.0
    %203 = vmatprep.subr.mxu0 0.0
    %204 = vmatpush1.msra.mxu0 0.0
    %205 = vmatprep.subr.mxu0 0.0
    %206 = vmatpush1.msra.mxu0 0.0
    %207 = vmatprep.subr.mxu0 0.0
    %208 = vmatpush1.msra.mxu0 0.0
    %209 = vmatprep.subr.mxu0 0.0
    %210 = vmatpush1.msra.mxu0 0.0
    %211 = vmatprep.subr.mxu0 0.0
    %212 = vmatpush1.msra.mxu0 0.0
    %213 = vmatprep.subr.mxu0 0.0
    %214 = vmatpush1.msra.mxu0 0.0
    %215 = vmatprep.subr.mxu0 0.0
    %216 = vmatpush1.msra.mxu0 0.0
    %217 = vmatprep.subr.mxu0 0.0
    %218 = vmatpush1.msra.mxu0 0.0
    %219 = vmatprep.subr.mxu0 0.0
    %220 = vmatpush1.msra.mxu0 0.0
    %221 = vmatprep.subr.mxu0 0.0
    %222 = vmatpush1.msra.mxu0 0.0
    %223 = vmatprep.subr.mxu0 0.0
    %224 = vmatpush1.msra.mxu0 0.0
    %225 = vmatprep.subr.mxu0 0.0
    %226 = vmatpush1.msra.mxu0 0.0
    %227 = vmatprep.subr.mxu0 0.0
    %v228 = vand.u32 %v43, 4294901760
    %v229 = vsub.f32 %v43, %v228
    %230 = vmatpush1.msra.mxu0 %v229
    %231 = vmatprep.subr.mxu0 0.0
    %232 = vmatpush2.msra.mxu0 0.0
    %233 = vmatprep.subr.mxu0 0.0
    %234 = vmatpush2.msra.mxu0 0.0
    %235 = vmatprep.subr.mxu0 0.0
    %236 = vmatpush2.msra.mxu0 0.0
    %237 = vmatprep.subr.mxu0 0.0
    %238 = vmatpush2.msra.mxu0 0.0
    %239 = vmatprep.subr.mxu0 0.0
    %240 = vmatpush2.msra.mxu0 0.0
    %241 = vmatprep.subr.mxu0 0.0
    %242 = vmatpush2.msra.mxu0 0.0
    %243 = vmatprep.subr.mxu0 0.0
    %244 = vmatpush2.msra.mxu0 0.0
    %245 = vmatprep.subr.mxu0 0.0
    %246 = vmatpush2.msra.mxu0 0.0
    %247 = vmatprep.subr.mxu0 0.0
    %248 = vmatpush2.msra.mxu0 0.0
    %249 = vmatprep.subr.mxu0 0.0
    %250 = vmatpush2.msra.mxu0 0.0
    %251 = vmatprep.subr.mxu0 0.0
    %252 = vmatpush2.msra.mxu0 0.0
    %253 = vmatprep.subr.mxu0 0.0
    %254 = vmatpush2.msra.mxu0 0.0
    %255 = vmatprep.subr.mxu0 0.0
    %256 = vmatpush2.msra.mxu0 0.0
    %257 = vmatprep.subr.mxu0 0.0
    %258 = vmatpush2.msra.mxu0 0.0
    %259 = vmatprep.subr.mxu0 0.0
    %260 = vmatpush2.msra.mxu0 0.0
    %261 = vmatprep.subr.mxu0 0.0
    %262 = vmatpush2.msra.mxu0 0.0
    %263 = vmatprep.mubr.f32.mxu0 0.0
    %v264 = vand.u32 %v39, 4294901760
    %v265 = vsub.f32 %v39, %v264
    %266 = vmatmul.mubr.f32.gmra.mxu0 %v265
    %v267 = vpop.f32.mrf.mxu0
    %v268 = vadd.f32 %v194, %v267
    %v269 = vpop.f32.mrf.mxu0
    %270 = vdwg.mxu0
    %271 = vmatprep.subr.mxu0 0.0
    %272 = vmatpush1.msra.mxu0 0.0
    %273 = vmatprep.subr.mxu0 0.0
    %274 = vmatpush1.msra.mxu0 0.0
    %275 = vmatprep.subr.mxu0 0.0
    %276 = vmatpush1.msra.mxu0 0.0
    %277 = vmatprep.subr.mxu0 0.0
    %278 = vmatpush1.msra.mxu0 0.0
    %279 = vmatprep.subr.mxu0 0.0
    %280 = vmatpush1.msra.mxu0 0.0
    %281 = vmatprep.subr.mxu0 0.0
    %282 = vmatpush1.msra.mxu0 0.0
    %283 = vmatprep.subr.mxu0 0.0
    %284 = vmatpush1.msra.mxu0 0.0
    %285 = vmatprep.subr.mxu0 0.0
    %286 = vmatpush1.msra.mxu0 0.0
    %287 = vmatprep.subr.mxu0 0.0
    %288 = vmatpush1.msra.mxu0 0.0
    %289 = vmatprep.subr.mxu0 0.0
    %290 = vmatpush1.msra.mxu0 0.0
    %291 = vmatprep.subr.mxu0 0.0
    %292 = vmatpush1.msra.mxu0 0.0
    %293 = vmatprep.subr.mxu0 0.0
    %294 = vmatpush1.msra.mxu0 0.0
    %295 = vmatprep.subr.mxu0 0.0
    %296 = vmatpush1.msra.mxu0 0.0
    %297 = vmatprep.subr.mxu0 0.0
    %298 = vmatpush1.msra.mxu0 0.0
    %299 = vmatprep.subr.mxu0 0.0
    %300 = vmatpush1.msra.mxu0 0.0
    %301 = vmatprep.subr.mxu0 0.0
    %v302 = vand.u32 %v43, 4294901760
    %303 = vmatpush1.msra.mxu0 %v302
    %304 = vmatprep.subr.mxu0 0.0
    %305 = vmatpush2.msra.mxu0 0.0
    %306 = vmatprep.subr.mxu0 0.0
    %307 = vmatpush2.msra.mxu0 0.0
    %308 = vmatprep.subr.mxu0 0.0
    %309 = vmatpush2.msra.mxu0 0.0
    %310 = vmatprep.subr.mxu0 0.0
    %311 = vmatpush2.msra.mxu0 0.0
    %312 = vmatprep.subr.mxu0 0.0
    %313 = vmatpush2.msra.mxu0 0.0
    %314 = vmatprep.subr.mxu0 0.0
    %315 = vmatpush2.msra.mxu0 0.0
    %316 = vmatprep.subr.mxu0 0.0
    %317 = vmatpush2.msra.mxu0 0.0
    %318 = vmatprep.subr.mxu0 0.0
    %319 = vmatpush2.msra.mxu0 0.0
    %320 = vmatprep.subr.mxu0 0.0
    %321 = vmatpush2.msra.mxu0 0.0
    %322 = vmatprep.subr.mxu0 0.0
    %323 = vmatpush2.msra.mxu0 0.0
    %324 = vmatprep.subr.mxu0 0.0
    %325 = vmatpush2.msra.mxu0 0.0
    %326 = vmatprep.subr.mxu0 0.0
    %327 = vmatpush2.msra.mxu0 0.0
    %328 = vmatprep.subr.mxu0 0.0
    %329 = vmatpush2.msra.mxu0 0.0
    %330 = vmatprep.subr.mxu0 0.0
    %331 = vmatpush2.msra.mxu0 0.0
    %332 = vmatprep.subr.mxu0 0.0
    %333 = vmatpush2.msra.mxu0 0.0
    %334 = vmatprep.subr.mxu0 0.0
    %335 = vmatpush2.msra.mxu0 0.0
    %336 = vmatprep.mubr.f32.mxu0 0.0
    %v337 = vand.u32 %v39, 4294901760
    %v338 = vsub.f32 %v39, %v337
    %v339 = vand.u32 %v338, 4294901760
    %340 = vmatmul.mubr.f32.gmra.mxu0 %v339
    %v341 = vpop.f32.mrf.mxu0
    %v342 = vadd.f32 %v268, %v341
    %v343 = vpop.f32.mrf.mxu0
    %344 = vdwg.mxu0
    %345 = vmatprep.subr.mxu0 0.0
    %346 = vmatpush1.msra.mxu0 0.0
    %347 = vmatprep.subr.mxu0 0.0
    %348 = vmatpush1.msra.mxu0 0.0
    %349 = vmatprep.subr.mxu0 0.0
    %350 = vmatpush1.msra.mxu0 0.0
    %351 = vmatprep.subr.mxu0 0.0
    %352 = vmatpush1.msra.mxu0 0.0
    %353 = vmatprep.subr.mxu0 0.0
    %354 = vmatpush1.msra.mxu0 0.0
    %355 = vmatprep.subr.mxu0 0.0
    %356 = vmatpush1.msra.mxu0 0.0
    %357 = vmatprep.subr.mxu0 0.0
    %358 = vmatpush1.msra.mxu0 0.0
    %359 = vmatprep.subr.mxu0 0.0
    %360 = vmatpush1.msra.mxu0 0.0
    %361 = vmatprep.subr.mxu0 0.0
    %362 = vmatpush1.msra.mxu0 0.0
    %363 = vmatprep.subr.mxu0 0.0
    %364 = vmatpush1.msra.mxu0 0.0
    %365 = vmatprep.subr.mxu0 0.0
    %366 = vmatpush1.msra.mxu0 0.0
    %367 = vmatprep.subr.mxu0 0.0
    %368 = vmatpush1.msra.mxu0 0.0
    %369 = vmatprep.subr.mxu0 0.0
    %370 = vmatpush1.msra.mxu0 0.0
    %371 = vmatprep.subr.mxu0 0.0
    %372 = vmatpush1.msra.mxu0 0.0
    %373 = vmatprep.subr.mxu0 0.0
    %374 = vmatpush1.msra.mxu0 0.0
    %375 = vmatprep.subr.mxu0 0.0
    %v376 = vand.u32 %v43, 4294901760
    %v377 = vsub.f32 %v43, %v376
    %v378 = vand.u32 %v377, 4294901760
    %379 = vmatpush1.msra.mxu0 %v378
    %380 = vmatprep.subr.mxu0 0.0
    %381 = vmatpush2.msra.mxu0 0.0
    %382 = vmatprep.subr.mxu0 0.0
    %383 = vmatpush2.msra.mxu0 0.0
    %384 = vmatprep.subr.mxu0 0.0
    %385 = vmatpush2.msra.mxu0 0.0
    %386 = vmatprep.subr.mxu0 0.0
    %387 = vmatpush2.msra.mxu0 0.0
    %388 = vmatprep.subr.mxu0 0.0
    %389 = vmatpush2.msra.mxu0 0.0
    %390 = vmatprep.subr.mxu0 0.0
    %391 = vmatpush2.msra.mxu0 0.0
    %392 = vmatprep.subr.mxu0 0.0
    %393 = vmatpush2.msra.mxu0 0.0
    %394 = vmatprep.subr.mxu0 0.0
    %395 = vmatpush2.msra.mxu0 0.0
    %396 = vmatprep.subr.mxu0 0.0
    %397 = vmatpush2.msra.mxu0 0.0
    %398 = vmatprep.subr.mxu0 0.0
    %399 = vmatpush2.msra.mxu0 0.0
    %400 = vmatprep.subr.mxu0 0.0
    %401 = vmatpush2.msra.mxu0 0.0
    %402 = vmatprep.subr.mxu0 0.0
    %403 = vmatpush2.msra.mxu0 0.0
    %404 = vmatprep.subr.mxu0 0.0
    %405 = vmatpush2.msra.mxu0 0.0
    %406 = vmatprep.subr.mxu0 0.0
    %407 = vmatpush2.msra.mxu0 0.0
    %408 = vmatprep.subr.mxu0 0.0
    %409 = vmatpush2.msra.mxu0 0.0
    %410 = vmatprep.subr.mxu0 0.0
    %411 = vmatpush2.msra.mxu0 0.0
    %412 = vmatprep.mubr.f32.mxu0 0.0
    %v413 = vand.u32 %v39, 4294901760
    %414 = vmatmul.mubr.f32.gmra.mxu0 %v413
    %v415 = vpop.f32.mrf.mxu0
    %v416 = vadd.f32 %v342, %v415
    %v417 = vpop.f32.mrf.mxu0
    %418 = vdwg.mxu0
    %419 = vmatprep.subr.mxu0 0.0
    %420 = vmatpush1.msra.mxu0 0.0
    %421 = vmatprep.subr.mxu0 0.0
    %422 = vmatpush1.msra.mxu0 0.0
    %423 = vmatprep.subr.mxu0 0.0
    %424 = vmatpush1.msra.mxu0 0.0
    %425 = vmatprep.subr.mxu0 0.0
    %426 = vmatpush1.msra.mxu0 0.0
    %427 = vmatprep.subr.mxu0 0.0
    %428 = vmatpush1.msra.mxu0 0.0
    %429 = vmatprep.subr.mxu0 0.0
    %430 = vmatpush1.msra.mxu0 0.0
    %431 = vmatprep.subr.mxu0 0.0
    %432 = vmatpush1.msra.mxu0 0.0
    %433 = vmatprep.subr.mxu0 0.0
    %434 = vmatpush1.msra.mxu0 0.0
    %435 = vmatprep.subr.mxu0 0.0
    %436 = vmatpush1.msra.mxu0 0.0
    %437 = vmatprep.subr.mxu0 0.0
    %438 = vmatpush1.msra.mxu0 0.0
    %439 = vmatprep.subr.mxu0 0.0
    %440 = vmatpush1.msra.mxu0 0.0
    %441 = vmatprep.subr.mxu0 0.0
    %442 = vmatpush1.msra.mxu0 0.0
    %443 = vmatprep.subr.mxu0 0.0
    %444 = vmatpush1.msra.mxu0 0.0
    %445 = vmatprep.subr.mxu0 0.0
    %446 = vmatpush1.msra.mxu0 0.0
    %447 = vmatprep.subr.mxu0 0.0
    %448 = vmatpush1.msra.mxu0 0.0
    %449 = vmatprep.subr.mxu0 0.0
    %v450 = vand.u32 %v43, 4294901760
    %451 = vmatpush1.msra.mxu0 %v450
    %452 = vmatprep.subr.mxu0 0.0
    %453 = vmatpush2.msra.mxu0 0.0
    %454 = vmatprep.subr.mxu0 0.0
    %455 = vmatpush2.msra.mxu0 0.0
    %456 = vmatprep.subr.mxu0 0.0
    %457 = vmatpush2.msra.mxu0 0.0
    %458 = vmatprep.subr.mxu0 0.0
    %459 = vmatpush2.msra.mxu0 0.0
    %460 = vmatprep.subr.mxu0 0.0
    %461 = vmatpush2.msra.mxu0 0.0
    %462 = vmatprep.subr.mxu0 0.0
    %463 = vmatpush2.msra.mxu0 0.0
    %464 = vmatprep.subr.mxu0 0.0
    %465 = vmatpush2.msra.mxu0 0.0
    %466 = vmatprep.subr.mxu0 0.0
    %467 = vmatpush2.msra.mxu0 0.0
    %468 = vmatprep.subr.mxu0 0.0
    %469 = vmatpush2.msra.mxu0 0.0
    %470 = vmatprep.subr.mxu0 0.0
    %471 = vmatpush2.msra.mxu0 0.0
    %472 = vmatprep.subr.mxu0 0.0
    %473 = vmatpush2.msra.mxu0 0.0
    %474 = vmatprep.subr.mxu0 0.0
    %475 = vmatpush2.msra.mxu0 0.0
    %476 = vmatprep.subr.mxu0 0.0
    %477 = vmatpush2.msra.mxu0 0.0
    %478 = vmatprep.subr.mxu0 0.0
    %479 = vmatpush2.msra.mxu0 0.0
    %480 = vmatprep.subr.mxu0 0.0
    %481 = vmatpush2.msra.mxu0 0.0
    %482 = vmatprep.subr.mxu0 0.0
    %483 = vmatpush2.msra.mxu0 0.0
    %484 = vmatprep.mubr.f32.mxu0 0.0
    %v485 = vand.u32 %v39, 4294901760
    %486 = vmatmul.mubr.f32.gmra.mxu0 %v485
    %v487 = vpop.f32.mrf.mxu0
    %v488 = vadd.f32 %v416, %v487
    %v489 = vpop.f32.mrf.mxu0
    %490 = vdwg.mxu0
    %v492 = vcombine.high %v488, %v488
    %v494 = vunpack.c.l.s4 1966171168
    %v495 = vunpack.c.0.s8 %v494
    %v496 = vlaneseq
    %v497 = vshrl.u32 %v496, 7
    %v498 = vsub.s32 %v495, %v497
    %v499 = vrot.slane %v488, %v498
    %v501 = vunpack.c.l.s4 1966171168
    %v502 = vunpack.c.0.s8 %v501
    %v503 = vlaneseq
    %v504 = vshrl.u32 %v503, 7
    %v505 = vsub.s32 %v502, %v504
    %v506 = vrot.slane %v492, %v505
    %v507 = vcombine.high %v499, %v499
    %v508 = vcombine.high %v506, %v506
    %v510 = vunpack.c.l.s4 1966171168
    %v511 = vunpack.c.0.s8 %v510
    %v512 = vlaneseq
    %v513 = vshrl.u32 %v512, 7
    %v514 = vsub.s32 %v511, %v513
    %v515 = vrot.slane %v499, %v514
    %v517 = vunpack.c.l.s4 1966171168
    %v518 = vunpack.c.0.s8 %v517
    %v519 = vlaneseq
    %v520 = vshrl.u32 %v519, 7
    %v521 = vsub.s32 %v518, %v520
    %v522 = vrot.slane %v506, %v521
    %v524 = vunpack.c.l.s4 1966171168
    %v525 = vunpack.c.0.s8 %v524
    %v526 = vlaneseq
    %v527 = vshrl.u32 %v526, 7
    %v528 = vsub.s32 %v525, %v527
    %v529 = vrot.slane %v507, %v528
    %v531 = vunpack.c.l.s4 1966171168
    %v532 = vunpack.c.0.s8 %v531
    %v533 = vlaneseq
    %v534 = vshrl.u32 %v533, 7
    %v535 = vsub.s32 %v532, %v534
    %v536 = vrot.slane %v508, %v535
    %v537 = vcombine.high %v515, %v515
    %v538 = vcombine.high %v522, %v522
    %v539 = vcombine.high %v529, %v529
    %v540 = vcombine.high %v536, %v536
    %v541 = vlaneseq
    %v542 = vshrl.u32 %v541, 7
    %v543 = vsub.s32 0, %v542
    %v544 = vrot.slane %v515, %v543
    %v545 = vlaneseq
    %v546 = vshrl.u32 %v545, 7
    %v547 = vsub.s32 0, %v546
    %v548 = vrot.slane %v529, %v547
    %v549 = vlaneseq
    %v550 = vshrl.u32 %v549, 7
    %v551 = vsub.s32 0, %v550
    %v552 = vrot.slane %v537, %v551
    %v553 = vlaneseq
    %v554 = vshrl.u32 %v553, 7
    %v555 = vsub.s32 0, %v554
    %v556 = vrot.slane %v539, %v555
    %v557 = vlaneseq
    %v558 = vshrl.u32 %v557, 7
    %v559 = vsub.s32 0, %v558
    %v560 = vrot.slane %v522, %v559
    %v561 = vlaneseq
    %v562 = vshrl.u32 %v561, 7
    %v563 = vsub.s32 0, %v562
    %v564 = vrot.slane %v536, %v563
    %v565 = vlaneseq
    %v566 = vshrl.u32 %v565, 7
    %v567 = vsub.s32 0, %v566
    %v568 = vrot.slane %v538, %v567
    %v569 = vlaneseq
    %v570 = vshrl.u32 %v569, 7
    %v571 = vsub.s32 0, %v570
    %v572 = vrot.slane %v540, %v571
    %vm581 = vcmask 125952
    %582 = vst.msk [vmem:[#allocation5] sm:$0xf] %vm581, %v544
    %583 = vst.msk [vmem:[#allocation5 + $0x4] sm:$0xf] %vm581, %v548
    %584 = vst.msk [vmem:[#allocation5 + $0x8] sm:$0xf] %vm581, %v552
    %585 = vst.msk [vmem:[#allocation5 + $0xc] sm:$0xf] %vm581, %v556
    %586 = vst.msk [vmem:[#allocation5 + $0x10] sm:$0xf] %vm581, %v560
    %587 = vst.msk [vmem:[#allocation5 + $0x14] sm:$0xf] %vm581, %v564
    %588 = vst.msk [vmem:[#allocation5 + $0x18] sm:$0xf] %vm581, %v568
    %589 = vst.msk [vmem:[#allocation5 + $0x1c] sm:$0xf] %vm581, %v572
    // Predicated region
    $region10: #{model_forward.1} parent=1 // pred_check
      _
    $region11: #{model_forward.1} parent=1 // pred_check_branch
      %591 = sbr.rel (0) target = $region13
    $region12: #{model_forward.1} parent=1 // pred_region
      %s593 = ssub.s32 512, 512
      %594 = vsyncadd [#allocation4], %s593
      %s595 = sshll.u32 [#allocation5], 4
      %s596 = int_to_ptr.vmem [resolvable:$true] %s595
      %601 = dma.vmem_to_hbm [thread:$0]  %s596, 512, %s1, [#allocation4], 64, 64, 4
    $region13: #{model_forward.1} parent=1 // pred_fallthru
      _
    // Predicated region
    $region14: #{model_forward.1} parent=1 // pred_check
      _
    $region15: #{model_forward.1} parent=1 // pred_check_branch
      %603 = sbr.rel (0) target = $region17
    $region16: #{model_forward.1} parent=1 // pred_region
      %604 = dma.done [#allocation4], 512
    $region17: #{model_forward.1} parent=1 // pred_fallthru
      _
    %605 = vsyncpa [#allocation3], 1
    %606 = vsyncpa [#allocation4], 1

</llo_original>
